<compile_context>
chip_gen: v7x
topology: tpu7x:2x2x1
jax: 0.10.0
libtpu: 0.0.40
codegen_flags: <defaults>
</compile_context>

<pallas_src>
import jax
import jax.numpy as jnp
from jax import lax
from jax.experimental import pallas as pl
from jax.experimental.pallas import tpu as pltpu


def _deepwide_kernel(ps_idx, qs_idx, rs_idx,          # scalar prefetch (SMEM)
                     ps_tbl, qs_tbl, rs_tbl,          # resident VMEM tables
                     w_ref,                           # (1, 3E) VMEM weight row
                     inf_ref, part_ref,               # (1, TB) / (1, 128) VMEM
                     ps_buf, qs_buf, rs_buf):         # (TB, E) VMEM gather bufs
    i = pl.program_id(0)
    tb, E = ps_buf.shape
    base = i * tb

    # ---- fused embedding gather: in-VMEM dynamic-index row copies ----
    def gather(r, carry):
        pi = ps_idx[base + r]
        qi = qs_idx[base + r]
        ri = rs_idx[base + r]
        ps_buf[pl.ds(r, 1), :] = ps_tbl[pl.ds(pi, 1), :]
        qs_buf[pl.ds(r, 1), :] = qs_tbl[pl.ds(qi, 1), :]
        rs_buf[pl.ds(r, 1), :] = rs_tbl[pl.ds(ri, 1), :]
        return carry

    lax.fori_loop(0, tb, gather, 0)

    ps = ps_buf[...].astype(jnp.float32)
    qs = qs_buf[...].astype(jnp.float32)
    rs = rs_buf[...].astype(jnp.float32)

    # FC(cat([ps, qs, rs], -1)): one lane-dense (tb, 3E) slab * (1, 3E) weight
    # row, then a single XLU lane reduce.  VPU path; MXU stays idle on purpose.
    x = jnp.concatenate([ps, qs, rs], axis=-1)           # (tb, 3E)
    w = w_ref[...].astype(jnp.float32)                   # (1, 3E)
    rows = jnp.sum(x * w, axis=-1)                       # (tb,)
    inf_ref[...] = rows.reshape(1, tb).astype(inf_ref.dtype)   # lane-dense store

    # Per-tile partial sums-of-squares (one per table) written into lanes
    # 0..2 of this tile's (1, 128) partials row.  Final sqrt/sum/scale happens
    # in the wrapper, so the batch grid axis is fully parallel.
    ssq_p = jnp.sum(ps * ps)
    ssq_q = jnp.sum(qs * qs)
    ssq_r = jnp.sum(rs * rs)
    lane = lax.broadcasted_iota(jnp.int32, (1, 128), 1)
    row = (jnp.where(lane == 0, ssq_p, 0.0)
           + jnp.where(lane == 1, ssq_q, 0.0)
           + jnp.where(lane == 2, ssq_r, 0.0))
    part_ref[...] = row.astype(part_ref.dtype)


def deepwide_triple_forward(ps, qs, rs, ps_table, qs_table, rs_table,
                            fc_weight, reg, tb=None):
    """ps/qs/rs: int [B]; *_table: [num, E]; fc_weight: [1, 3E] (PyTorch layout)."""
    B = ps.shape[0]
    E = ps_table.shape[1]

    if tb is None:
        # Lane-dense output blocks need tb % 128 == 0 unless tb == B (single
        # tile).  The gather loop is dynamic, so a single large tile for a
        # non-128-multiple batch is fine.
        tb = min(B, 2048) if B % 128 == 0 else B
    assert B % tb == 0, "batch must be divisible by the batch tile"
    nb = B // tb

    tables_bytes = (ps_table.size * ps_table.dtype.itemsize
                    + qs_table.size * qs_table.dtype.itemsize
                    + rs_table.size * rs_table.dtype.itemsize)
    # Keep resident tables comfortably inside v7x's 64 MiB VMEM.
    # TODO(synk): for tables larger than this budget, fall back to an HBM
    # (memory_space=pl.ANY) double-buffered row-gather pipeline.
    assert tables_bytes <= (24 << 20), "embedding tables too large for VMEM residency"

    w_row = fc_weight.reshape(1, 3 * E).astype(jnp.float32)

    buf_bytes = 3 * tb * E * 4
    out_bytes = (B + 128 * nb) * 4
    w_bytes = w_row.size * 4
    vmem_need = 2 * (tables_bytes + w_bytes) + buf_bytes + 2 * out_bytes
    vmem_limit = int(min(max(vmem_need + (8 << 20), 32 << 20), 48 << 20))

    grid_spec = pltpu.PrefetchScalarGridSpec(
        num_scalar_prefetch=3,                   # ps/qs/rs indices -> SMEM
        grid=(nb,),
        in_specs=[
            # Tables resident in VMEM (constant index_map, loaded once).
            pl.BlockSpec(ps_table.shape, lambda i, pi, qi, ri: (0, 0)),
            pl.BlockSpec(qs_table.shape, lambda i, pi, qi, ri: (0, 0)),
            pl.BlockSpec(rs_table.shape, lambda i, pi, qi, ri: (0, 0)),
            pl.BlockSpec((1, 3 * E), lambda i, pi, qi, ri: (0, 0)),   # FC weight
        ],
        out_specs=(
            pl.BlockSpec((1, tb), lambda i, pi, qi, ri: (0, i)),      # inferences row
            pl.BlockSpec((1, 128), lambda i, pi, qi, ri: (0, i)),     # per-tile ssq partials
        ),
        scratch_shapes=[
            pltpu.VMEM((tb, E), ps_table.dtype),
            pltpu.VMEM((tb, E), qs_table.dtype),
            pltpu.VMEM((tb, E), rs_table.dtype),
        ],
    )

    inf_row, partials = pl.pallas_call(
        _deepwide_kernel,
        grid_spec=grid_spec,
        out_shape=(
            jax.ShapeDtypeStruct((1, B), jnp.float32),
            jax.ShapeDtypeStruct((1, 128 * nb), jnp.float32),
        ),
        compiler_params=pltpu.CompilerParams(
            # Every batch tile is independent (partial ssq per tile), so the
            # batch axis can be sharded across TensorCores on v7x.
            dimension_semantics=("parallel",),
            vmem_limit_bytes=vmem_limit,
        ),
    )(ps.astype(jnp.int32), qs.astype(jnp.int32), rs.astype(jnp.int32),
      ps_table, qs_table, rs_table, w_row)

    # Scalar epilogue: sqrt(sum of per-tile partials) per table, scaled by reg.
    ssq = partials.reshape(nb, 128)[:, :3].sum(axis=0)          # (3,)
    regs = reg * (jnp.sqrt(ssq[0]) + jnp.sqrt(ssq[1]) + jnp.sqrt(ssq[2]))
    return inf_row.reshape(B, 1), regs


class DeepWideTripleJAX:
    def __init__(self, num_ps, num_qs, num_rs, embedding_dim, reg, key):
        self.reg = float(reg)
        kp, kq, kr, kw = jax.random.split(key, 4)
        # deterministic synthetic params (shapes match nn.Embedding / nn.Linear)
        self.ps_table = jax.random.normal(kp, (num_ps, embedding_dim), jnp.float32)
        self.qs_table = jax.random.normal(kq, (num_qs, embedding_dim), jnp.float32)
        self.rs_table = jax.random.normal(kr, (num_rs, embedding_dim), jnp.float32)
        bound = 1.0 / (3 * embedding_dim) ** 0.5
        self.fc_weight = jax.random.uniform(
            kw, (1, 3 * embedding_dim), jnp.float32, -bound, bound)

    def __call__(self, ps, qs, rs):
        # TODO(synk): `constrain(...)` on the FC weight is undefined in the
        # reference source; treated as identity here.
        return deepwide_triple_forward(ps, qs, rs, self.ps_table,
                                       self.qs_table, self.rs_table,
                                       self.fc_weight, self.reg)


if __name__ == "__main__":
    key = jax.random.PRNGKey(0)
    num_ps, num_qs, num_rs = 16, 24, 20
    embedding_dim = 32
    reg = 1e-3
    B = 8

    kmodel, kidx = jax.random.split(key)
    model = DeepWideTripleJAX(num_ps, num_qs, num_rs, embedding_dim, reg, kmodel)

    k1, k2, k3 = jax.random.split(kidx, 3)
    ps = jax.random.randint(k1, (B,), 0, num_ps)
    qs = jax.random.randint(k2, (B,), 0, num_qs)
    rs = jax.random.randint(k3, (B,), 0, num_rs)

    inferences, regs = model(ps, qs, rs)
    jax.block_until_ready((inferences, regs))

    # sanity check against plain-JAX reference
    ps_e = jnp.take(model.ps_table, ps, axis=0)
    qs_e = jnp.take(model.qs_table, qs, axis=0)
    rs_e = jnp.take(model.rs_table, rs, axis=0)
    ref_inf = jnp.concatenate([ps_e, qs_e, rs_e], axis=-1) @ model.fc_weight.T
    ref_regs = reg * (jnp.linalg.norm(ps_e) + jnp.linalg.norm(qs_e)
                      + jnp.linalg.norm(rs_e))
    assert inferences.shape == (B, 1)
    assert jnp.allclose(inferences, ref_inf, atol=1e-5), "inference mismatch"
    assert jnp.allclose(regs, ref_regs, atol=1e-5), "regs mismatch"

    print("KERNEL_OK")
</pallas_src>

<mosaic_0001>
module attributes {stable_mosaic.version = 11 : i64} {
  func.func @_deepwide_kernel(%arg0: i32, %arg1: memref<8xi32, #tpu.memory_space<smem>>, %arg2: memref<8xi32, #tpu.memory_space<smem>>, %arg3: memref<8xi32, #tpu.memory_space<smem>>, %arg4: memref<16x32xf32, #tpu.memory_space<vmem>>, %arg5: memref<24x32xf32, #tpu.memory_space<vmem>>, %arg6: memref<20x32xf32, #tpu.memory_space<vmem>>, %arg7: memref<1x96xf32, #tpu.memory_space<vmem>>, %arg8: memref<1x8xf32, #tpu.memory_space<vmem>>, %arg9: memref<1x128xf32, #tpu.memory_space<vmem>>, %arg10: memref<8x32xf32, #tpu.memory_space<vmem>>, %arg11: memref<8x32xf32, #tpu.memory_space<vmem>>, %arg12: memref<8x32xf32, #tpu.memory_space<vmem>>) attributes {dimension_semantics = [#tpu.dimension_semantics<parallel>], iteration_bounds = array<i64: 1>, scalar_prefetch = 3 : i64, scratch_operands = 3 : i64, tpu.core_type = #tpu.core_type<tc>, window_params = [{pipeline_mode = #tpu.pipeline_mode<synchronous>, transform_indices = @transform_0, window_bounds = array<i64: 16, 32>}, {pipeline_mode = #tpu.pipeline_mode<synchronous>, transform_indices = @transform_1, window_bounds = array<i64: 24, 32>}, {pipeline_mode = #tpu.pipeline_mode<synchronous>, transform_indices = @transform_2, window_bounds = array<i64: 20, 32>}, {pipeline_mode = #tpu.pipeline_mode<synchronous>, transform_indices = @transform_3, window_bounds = array<i64: 1, 96>}, {transform_indices = @transform_4, window_bounds = array<i64: 1, 8>}, {transform_indices = @transform_5, window_bounds = array<i64: 1, 128>}]} {
    %c8_i32 = arith.constant 8 : i32
    %0 = arith.muli %arg0, %c8_i32 : i32
    %c0_i32 = arith.constant 0 : i32
    %c8_i32_0 = arith.constant 8 : i32
    %1 = arith.addi %c0_i32, %c8_i32_0 : i32
    %c1_i32 = arith.constant 1 : i32
    scf.for %arg13 = %c0_i32 to %1 step %c1_i32  : i32 {
      %46 = arith.addi %0, %arg13 : i32
      %47 = arith.index_cast %46 : i32 to index
      %48 = memref.load %arg1[%47] : memref<8xi32, #tpu.memory_space<smem>>
      %49 = arith.addi %0, %arg13 : i32
      %50 = arith.index_cast %49 : i32 to index
      %51 = memref.load %arg2[%50] : memref<8xi32, #tpu.memory_space<smem>>
      %52 = arith.addi %0, %arg13 : i32
      %53 = arith.index_cast %52 : i32 to index
      %54 = memref.load %arg3[%53] : memref<8xi32, #tpu.memory_space<smem>>
      %55 = arith.index_cast %48 : i32 to index
      %c0_21 = arith.constant 0 : index
      %56 = vector.load %arg4[%55, %c0_21] : memref<16x32xf32, #tpu.memory_space<vmem>>, vector<1x32xf32>
      %57 = arith.index_cast %arg13 : i32 to index
      %c0_22 = arith.constant 0 : index
      %58 = vector.load %arg10[%57, %c0_22] : memref<8x32xf32, #tpu.memory_space<vmem>>, vector<1x32xf32>
      tpu.vector_store %arg10[%57, %c0_22], %56 {strides = array<i32>} : memref<8x32xf32, #tpu.memory_space<vmem>>, vector<1x32xf32>,
      %59 = arith.index_cast %51 : i32 to index
      %c0_23 = arith.constant 0 : index
      %60 = vector.load %arg5[%59, %c0_23] : memref<24x32xf32, #tpu.memory_space<vmem>>, vector<1x32xf32>
      %61 = arith.index_cast %arg13 : i32 to index
      %c0_24 = arith.constant 0 : index
      %62 = vector.load %arg11[%61, %c0_24] : memref<8x32xf32, #tpu.memory_space<vmem>>, vector<1x32xf32>
      tpu.vector_store %arg11[%61, %c0_24], %60 {strides = array<i32>} : memref<8x32xf32, #tpu.memory_space<vmem>>, vector<1x32xf32>,
      %63 = arith.index_cast %54 : i32 to index
      %c0_25 = arith.constant 0 : index
      %64 = vector.load %arg6[%63, %c0_25] : memref<20x32xf32, #tpu.memory_space<vmem>>, vector<1x32xf32>
      %65 = arith.index_cast %arg13 : i32 to index
      %c0_26 = arith.constant 0 : index
      %66 = vector.load %arg12[%65, %c0_26] : memref<8x32xf32, #tpu.memory_space<vmem>>, vector<1x32xf32>
      tpu.vector_store %arg12[%65, %c0_26], %64 {strides = array<i32>} : memref<8x32xf32, #tpu.memory_space<vmem>>, vector<1x32xf32>,
    }
    %c8_i32_1 = arith.constant 8 : i32
    %c0 = arith.constant 0 : index
    %c0_2 = arith.constant 0 : index
    %2 = vector.load %arg10[%c0, %c0_2] : memref<8x32xf32, #tpu.memory_space<vmem>>, vector<8x32xf32>
    %c0_3 = arith.constant 0 : index
    %c0_4 = arith.constant 0 : index
    %3 = vector.load %arg11[%c0_3, %c0_4] : memref<8x32xf32, #tpu.memory_space<vmem>>, vector<8x32xf32>
    %c0_5 = arith.constant 0 : index
    %c0_6 = arith.constant 0 : index
    %4 = vector.load %arg12[%c0_5, %c0_6] : memref<8x32xf32, #tpu.memory_space<vmem>>, vector<8x32xf32>
    %5 = tpu.concatenate %2, %3, %4 in 1 : vector<8x32xf32>, vector<8x32xf32>, vector<8x32xf32> -> vector<8x96xf32>
    %c0_7 = arith.constant 0 : index
    %c0_8 = arith.constant 0 : index
    %6 = vector.load %arg7[%c0_7, %c0_8] : memref<1x96xf32, #tpu.memory_space<vmem>>, vector<1x96xf32>
    %7 = vector.broadcast %6 : vector<1x96xf32> to vector<8x96xf32>
    %8 = arith.mulf %5, %7 : vector<8x96xf32>
    %cst = arith.constant dense<0.000000e+00> : vector<8xf32>
    %9 = vector.multi_reduction <add>, %8, %cst [1] : vector<8x96xf32> to vector<8xf32>
    %10 = vector.shape_cast %9 : vector<8xf32> to vector<1x8xf32>
    %c0_9 = arith.constant 0 : index
    %c0_10 = arith.constant 0 : index
    %11 = vector.load %arg8[%c0_9, %c0_10] : memref<1x8xf32, #tpu.memory_space<vmem>>, vector<1x8xf32>
    tpu.vector_store %arg8[%c0_9, %c0_10], %10 {strides = array<i32>} : memref<1x8xf32, #tpu.memory_space<vmem>>, vector<1x8xf32>,
    %12 = arith.mulf %2, %2 : vector<8x32xf32>
    %13 = vector.shape_cast %12 : vector<8x32xf32> to vector<1x8x32xf32>
    %cst_11 = arith.constant dense<0.000000e+00> : vector<1xf32>
    %14 = vector.multi_reduction <add>, %13, %cst_11 [1, 2] : vector<1x8x32xf32> to vector<1xf32>
    %15 = vector.shape_cast %14 : vector<1xf32> to vector<1x1x1xf32>
    %16 = vector.extract %15[0, 0, 0] : f32 from vector<1x1x1xf32>
    %17 = arith.mulf %3, %3 : vector<8x32xf32>
    %18 = vector.shape_cast %17 : vector<8x32xf32> to vector<1x8x32xf32>
    %cst_12 = arith.constant dense<0.000000e+00> : vector<1xf32>
    %19 = vector.multi_reduction <add>, %18, %cst_12 [1, 2] : vector<1x8x32xf32> to vector<1xf32>
    %20 = vector.shape_cast %19 : vector<1xf32> to vector<1x1x1xf32>
    %21 = vector.extract %20[0, 0, 0] : f32 from vector<1x1x1xf32>
    %22 = arith.mulf %4, %4 : vector<8x32xf32>
    %23 = vector.shape_cast %22 : vector<8x32xf32> to vector<1x8x32xf32>
    %cst_13 = arith.constant dense<0.000000e+00> : vector<1xf32>
    %24 = vector.multi_reduction <add>, %23, %cst_13 [1, 2] : vector<1x8x32xf32> to vector<1xf32>
    %25 = vector.shape_cast %24 : vector<1xf32> to vector<1x1x1xf32>
    %26 = vector.extract %25[0, 0, 0] : f32 from vector<1x1x1xf32>
    %27 = tpu.iota {dimensions = array<i32: 1>} : vector<1x128xi32>
    %c0_i32_14 = arith.constant 0 : i32
    %28 = vector.broadcast %c0_i32_14 : i32 to vector<1x128xi32>
    %29 = arith.cmpi eq, %27, %28 : vector<1x128xi32>
    %cst_15 = arith.constant 0.000000e+00 : f32
    %30 = vector.broadcast %16 : f32 to vector<1x128xf32>
    %31 = vector.broadcast %cst_15 : f32 to vector<1x128xf32>
    %32 = arith.select %29, %30, %31 : vector<1x128xi1>, vector<1x128xf32>
    %c1_i32_16 = arith.constant 1 : i32
    %33 = vector.broadcast %c1_i32_16 : i32 to vector<1x128xi32>
    %34 = arith.cmpi eq, %27, %33 : vector<1x128xi32>
    %cst_17 = arith.constant 0.000000e+00 : f32
    %35 = vector.broadcast %21 : f32 to vector<1x128xf32>
    %36 = vector.broadcast %cst_17 : f32 to vector<1x128xf32>
    %37 = arith.select %34, %35, %36 : vector<1x128xi1>, vector<1x128xf32>
    %38 = arith.addf %32, %37 : vector<1x128xf32>
    %c2_i32 = arith.constant 2 : i32
    %39 = vector.broadcast %c2_i32 : i32 to vector<1x128xi32>
    %40 = arith.cmpi eq, %27, %39 : vector<1x128xi32>
    %cst_18 = arith.constant 0.000000e+00 : f32
    %41 = vector.broadcast %26 : f32 to vector<1x128xf32>
    %42 = vector.broadcast %cst_18 : f32 to vector<1x128xf32>
    %43 = arith.select %40, %41, %42 : vector<1x128xi1>, vector<1x128xf32>
    %44 = arith.addf %38, %43 : vector<1x128xf32>
    %c0_19 = arith.constant 0 : index
    %c0_20 = arith.constant 0 : index
    %45 = vector.load %arg9[%c0_19, %c0_20] : memref<1x128xf32, #tpu.memory_space<vmem>>, vector<1x128xf32>
    tpu.vector_store %arg9[%c0_19, %c0_20], %44 {strides = array<i32>} : memref<1x128xf32, #tpu.memory_space<vmem>>, vector<1x128xf32>,
    return
  }
  func.func @transform_0(%arg0: i32, %arg1: memref<8xi32, #tpu.memory_space<smem>>, %arg2: memref<8xi32, #tpu.memory_space<smem>>, %arg3: memref<8xi32, #tpu.memory_space<smem>>) -> (i32, i32) {
    %c0_i32 = arith.constant 0 : i32
    %c0_i32_0 = arith.constant 0 : i32
    %c0_i32_1 = arith.constant 0 : i32
    return %c0_i32, %c0_i32_0 : i32, i32
  }
  func.func @transform_1(%arg0: i32, %arg1: memref<8xi32, #tpu.memory_space<smem>>, %arg2: memref<8xi32, #tpu.memory_space<smem>>, %arg3: memref<8xi32, #tpu.memory_space<smem>>) -> (i32, i32) {
    %c0_i32 = arith.constant 0 : i32
    %c0_i32_0 = arith.constant 0 : i32
    %c0_i32_1 = arith.constant 0 : i32
    return %c0_i32, %c0_i32_0 : i32, i32
  }
  func.func @transform_2(%arg0: i32, %arg1: memref<8xi32, #tpu.memory_space<smem>>, %arg2: memref<8xi32, #tpu.memory_space<smem>>, %arg3: memref<8xi32, #tpu.memory_space<smem>>) -> (i32, i32) {
    %c0_i32 = arith.constant 0 : i32
    %c0_i32_0 = arith.constant 0 : i32
    %c0_i32_1 = arith.constant 0 : i32
    return %c0_i32, %c0_i32_0 : i32, i32
  }
  func.func @transform_3(%arg0: i32, %arg1: memref<8xi32, #tpu.memory_space<smem>>, %arg2: memref<8xi32, #tpu.memory_space<smem>>, %arg3: memref<8xi32, #tpu.memory_space<smem>>) -> (i32, i32) {
    %c0_i32 = arith.constant 0 : i32
    %c0_i32_0 = arith.constant 0 : i32
    %c0_i32_1 = arith.constant 0 : i32
    return %c0_i32, %c0_i32_0 : i32, i32
  }
  func.func @transform_4(%arg0: i32, %arg1: memref<8xi32, #tpu.memory_space<smem>>, %arg2: memref<8xi32, #tpu.memory_space<smem>>, %arg3: memref<8xi32, #tpu.memory_space<smem>>) -> (i32, i32) {
    %c0_i32 = arith.constant 0 : i32
    %c0_i32_0 = arith.constant 0 : i32
    return %c0_i32, %arg0 : i32, i32
  }
  func.func @transform_5(%arg0: i32, %arg1: memref<8xi32, #tpu.memory_space<smem>>, %arg2: memref<8xi32, #tpu.memory_space<smem>>, %arg3: memref<8xi32, #tpu.memory_space<smem>>) -> (i32, i32) {
    %c0_i32 = arith.constant 0 : i32
    %c0_i32_0 = arith.constant 0 : i32
    return %c0_i32, %arg0 : i32, i32
  }
}

</mosaic_0001>

<llo_original>
// kernel: tpu_custom_call.1
$region0: #{tpu_custom_call.1}
  #allocation0 [shape = 'u32[]', space=smem, size = 0x4, offset = 0x4, fixed_abs, tag = 'smem constant byte address 0x4 - core index']
  #allocation1 [shape = 'u32[144,128]{1,0:T(1,128)}', space=vmem, size = 0x12000, scoped, tag = 'internal scratch']
  #allocation2 [shape = 'f32[8,32]{1,0:T(8,128)}', space=vmem, size = 0x1000, scoped, tag = 'scratch operand']
  #allocation3 [shape = 'f32[8,32]{1,0:T(8,128)}', space=vmem, size = 0x1000, scoped, tag = 'scratch operand']
  #allocation4 [shape = 'f32[8,32]{1,0:T(8,128)}', space=vmem, size = 0x1000, scoped, tag = 'scratch operand']
  #allocation5 [shape = 's32[1]{0}', space=sflag, size = 0x4, scoped, tag = 'scoped memory for tpu_custom_call.1']
  #allocation6 [shape = 'u8[512]{0}', space=smem, size = 0x200, scoped, tag = 'prefetched SMEM operand 0']
  #allocation7 [shape = 'u8[512]{0}', space=smem, size = 0x200, scoped, tag = 'prefetched SMEM operand 1']
  #allocation8 [shape = 'u8[512]{0}', space=smem, size = 0x200, scoped, tag = 'prefetched SMEM operand 2']
  %s0 = inlined_call_operand.hbm [shape: s32[8], index: 0, kind: input, shape index: {}]
  %s1 = inlined_call_operand.vmem [shape: s32[8], index: 1, kind: input, shape index: {}]
  %s2 = inlined_call_operand.vmem [shape: s32[8], index: 2, kind: input, shape index: {}]
  %s3 = inlined_call_operand.hbm [shape: f32[16,32], index: 3, kind: input, shape index: {}]
  %s4 = inlined_call_operand.hbm [shape: f32[24,32], index: 4, kind: input, shape index: {}]
  %s5 = inlined_call_operand.hbm [shape: f32[20,32], index: 5, kind: input, shape index: {}]
  %s6 = inlined_call_operand.vmem [shape: f32[1,96], index: 6, kind: input, shape index: {}]
  %s7 = inlined_call_operand.hbm [shape: f32[1,8], index: 7, kind: output, shape index: {0}]
  %s8 = inlined_call_operand.hbm [shape: f32[1,128], index: 8, kind: output, shape index: {1}]
  %9 = xla_tuple %s7, %s8
  %s10 = sld [smem:[#allocation0]]
  $region53: #{tpu_custom_call.1} parent=0
    _
  %s12 = ssub.s32 1, %s10
  %s13 = scalar_select 0, %s12, %s10
  %15 = dma.hbm_to_smem %s0, 16, [#allocation6], [#allocation5]
  %s16 = sshll.u32 %s1, 4
  %s17 = int_to_ptr.vmem [resolvable:$true] %s16
  %19 = dma.vmem_to_smem %s17, 16, [#allocation7], [#allocation5]
  %s20 = sshll.u32 %s2, 4
  %s21 = int_to_ptr.vmem [resolvable:$true] %s20
  %23 = dma.vmem_to_smem %s21, 16, [#allocation8], [#allocation5]
  %24 = dma.done [#allocation5], 48
  %25 = sfence
  $region1: #{tpu_custom_call.1} parent=0
    #allocation9 [shape = 'u8[8192]{0}', space=vmem, size = 0x2000, scoped, tag = 'input window, operand 3, single buffered']
    #allocation10 [shape = 's32[1]{0}', space=sflag, size = 0x4, scoped, tag = 'scoped memory for tpu_custom_call.1']
    #allocation11 [shape = 's32[1]{0}', space=sflag, size = 0x4, scoped, tag = 'scoped memory for tpu_custom_call.1']
    #allocation12 [shape = 'u8[12288]{0}', space=vmem, size = 0x3000, scoped, tag = 'input window, operand 4, single buffered']
    #allocation13 [shape = 's32[1]{0}', space=sflag, size = 0x4, scoped, tag = 'scoped memory for tpu_custom_call.1']
    #allocation14 [shape = 'u8[12288]{0}', space=vmem, size = 0x3000, scoped, tag = 'input window, operand 5, single buffered']
    #allocation15 [shape = 'u8[512]{0}', space=vmem, size = 0x400, scoped, tag = 'output window, operand 0, single buffered']
    #allocation16 [shape = 'u8[512]{0}', space=vmem, size = 0x400, scoped, tag = 'output window, operand 1, single buffered']
    #allocation17 [shape = 's32[1]{0}', space=sflag, size = 0x4, scoped, tag = 'scoped memory for tpu_custom_call.1']
    %26 = vsyncpa [#allocation10], 0
    %27 = vsyncpa [#allocation13], 0
    %28 = vsyncpa [#allocation11], 0
    %29 = vsyncpa [#allocation17], 0
    // Predicated region
    $region2: #{tpu_custom_call.1} parent=1 // pred_check
      _
    $region3: #{tpu_custom_call.1} parent=1 // pred_check_branch
      %31 = sbr.rel (0) target = $region5
    $region4: #{tpu_custom_call.1} parent=1 // pred_region
      %s33 = ssub.s32 256, 256
      %34 = vsyncadd [#allocation10], %s33
      %s35 = sshll.u32 [#allocation9], 4
      %s36 = int_to_ptr.vmem [resolvable:$true] %s35
      %41 = dma.hbm_to_vmem [thread:$0]  %s3, 256, %s36, [#allocation10], 128, 128, 8
    $region5: #{tpu_custom_call.1} parent=1 // pred_fallthru
      _
    // Predicated region
    $region6: #{tpu_custom_call.1} parent=1 // pred_check
      _
    $region7: #{tpu_custom_call.1} parent=1 // pred_check_branch
      %43 = sbr.rel (0) target = $region9
    $region8: #{tpu_custom_call.1} parent=1 // pred_region
      %s45 = ssub.s32 384, 384
      %46 = vsyncadd [#allocation13], %s45
      %s47 = sshll.u32 [#allocation12], 4
      %s48 = int_to_ptr.vmem [resolvable:$true] %s47
      %53 = dma.hbm_to_vmem [thread:$0]  %s4, 384, %s48, [#allocation13], 128, 128, 8
    $region9: #{tpu_custom_call.1} parent=1 // pred_fallthru
      _
    // Predicated region
    $region10: #{tpu_custom_call.1} parent=1 // pred_check
      _
    $region11: #{tpu_custom_call.1} parent=1 // pred_check_branch
      %55 = sbr.rel (0) target = $region13
    $region12: #{tpu_custom_call.1} parent=1 // pred_region
      %s57 = ssub.s32 384, 384
      %58 = vsyncadd [#allocation13], %s57
      %s59 = sshll.u32 [#allocation14], 4
      %s60 = int_to_ptr.vmem [resolvable:$true] %s59
      %65 = dma.hbm_to_vmem [thread:$0]  %s5, 384, %s60, [#allocation13], 128, 128, 8
    $region13: #{tpu_custom_call.1} parent=1 // pred_fallthru
      _
    // Predicated region
    $region14: #{tpu_custom_call.1} parent=1 // pred_check
      _
    $region15: #{tpu_custom_call.1} parent=1 // pred_check_branch
      %67 = sbr.rel (0) target = $region17
    $region16: #{tpu_custom_call.1} parent=1 // pred_region
      _
    $region17: #{tpu_custom_call.1} parent=1 // pred_fallthru
      _
    // Predicated region
    $region18: #{tpu_custom_call.1} parent=1 // pred_check
      _
    $region19: #{tpu_custom_call.1} parent=1 // pred_check_branch
      %69 = sbr.rel (0) target = $region21
    $region20: #{tpu_custom_call.1} parent=1 // pred_region
      %70 = dma.done [#allocation10], 256
    $region21: #{tpu_custom_call.1} parent=1 // pred_fallthru
      _
    // Predicated region
    $region22: #{tpu_custom_call.1} parent=1 // pred_check
      _
    $region23: #{tpu_custom_call.1} parent=1 // pred_check_branch
      %72 = sbr.rel (0) target = $region25
    $region24: #{tpu_custom_call.1} parent=1 // pred_region
      %73 = dma.done [#allocation13], 384
    $region25: #{tpu_custom_call.1} parent=1 // pred_fallthru
      _
    // Predicated region
    $region26: #{tpu_custom_call.1} parent=1 // pred_check
      _
    $region27: #{tpu_custom_call.1} parent=1 // pred_check_branch
      %75 = sbr.rel (0) target = $region29
    $region28: #{tpu_custom_call.1} parent=1 // pred_region
      %76 = dma.done [#allocation13], 384
    $region29: #{tpu_custom_call.1} parent=1 // pred_fallthru
      _
    %s77 = smul.u32 0, 8
    loop: start=0, step=1, limit=8
    $region30: #{tpu_custom_call.1} parent=1 // loop_pre_header
      _
    $region31: #{tpu_custom_call.1} parent=1 // loop_header
      %s79 = sphi 0, %s83
      %p80 = scmp.ge.s32.totalorder %s79, 8
    $region32: #{tpu_custom_call.1} parent=1 // loop_header_branch
      %82 = sbr.rel (%p80) target = $region36
    $region33: #{tpu_custom_call.1} parent=1 // loop_body
      %s84 = sadd.s32 %s77, %s79
      %s85 = sld [smem:[#allocation6 + %s84]]
      %s86 = sld [smem:[#allocation7 + %s84]]
      %s87 = sld [smem:[#allocation8 + %s84]]
      %s88 = scalar_lea.vmem [#allocation9], %s85
      %v89 = vld [vmem:[%s88] sm:$0x1]
      %s90 = scalar_lea.vmem [#allocation2], %s79
      %vm91 = vcmask 253952
      %92 = vst.msk [vmem:[%s90] sm:$0x1] %vm91, %v89
      %s93 = scalar_lea.vmem [#allocation12], %s86
      %v94 = vld [vmem:[%s93] sm:$0x1]
      %s95 = scalar_lea.vmem [#allocation3], %s79
      %96 = vst.msk [vmem:[%s95] sm:$0x1] %vm91, %v94
      %s97 = scalar_lea.vmem [#allocation14], %s87
      %v98 = vld [vmem:[%s97] sm:$0x1]
      %s99 = scalar_lea.vmem [#allocation4], %s79
      %100 = vst.msk [vmem:[%s99] sm:$0x1] %vm91, %v98
    $region34: #{tpu_custom_call.1} parent=1 // loop_footer
      %s83 = sadd.s32 1, %s79
    $region35: #{tpu_custom_call.1} parent=1 // loop_footer_branch
      %78 = sbr.rel target = $region31
    $region36: #{tpu_custom_call.1} parent=1 // loop_exit
      _
    %v101 = vld [vmem:[#allocation2] sm:$0xff]
    %v102 = vld [vmem:[#allocation3] sm:$0xff]
    %v103 = vld [vmem:[#allocation4] sm:$0xff]
    %105 = vrot.lane.b32.xlu0 %v102, 32
    %v106 = vpop.permute.xlu0 %105
    %109 = vrot.lane.b32.xlu0 %v103, 64
    %v110 = vpop.permute.xlu0 %109
    %vm112 = vcmask 261120
    %v113 = vsel %vm112, %v101, %v106
    %vm114 = vcmask 523264
    %v115 = vsel %vm114, %v113, %v110
    %v116 = vld [vmem:[%s6] sm:$0x1]
    %v118 = vlaneseq
    %v119 = vshrl.u32 %v118, 7
    %v120 = vsub.s32 0, %v119
    %v121 = vrot.slane %v116, %v120
    %v123 = vmul.f32 %v115, %v121
    %vm124 = vcmask 785408
    %v125 = vsel %vm124, %v123, 0.0
    %126 = vadd.xlane.f32.xlu0 %v125
    %v127 = vpop.xlane.xlu0 %126
    %v129 = vlaneseq
    %v130 = vand.u32 %v129, 127
    %v131 = vlaneseq
    %v132 = vshrl.u32 %v131, 7
    %v133 = vsub.s32 %v130, %v132
    %v134 = vrot.slane %v127, %v133
    %vm136 = vcmask 57344
    %137 = vst.msk [vmem:[#allocation15] sm:$0x1] %vm136, %v134
    %v138 = vmul.f32 %v101, %v101
    %v139 = vsel %vm112, %v138, 0.0
    %140 = vadd.xlane.f32.xlu0 %v139
    %v141 = vpop.xlane.xlu0 %140
    %v142 = vrot.slane %v141, 4
    %v143 = vadd.f32 %v141, %v142
    %v144 = vrot.slane %v143, 2
    %v145 = vadd.f32 %v143, %v144
    %v146 = vrot.slane %v145, 1
    %v147 = vadd.f32 %v145, %v146
    %s148 = vtos %v147
    %v149 = vmul.f32 %v102, %v102
    %v150 = vsel %vm112, %v149, 0.0
    %151 = vadd.xlane.f32.xlu0 %v150
    %v152 = vpop.xlane.xlu0 %151
    %v153 = vrot.slane %v152, 4
    %v154 = vadd.f32 %v152, %v153
    %v155 = vrot.slane %v154, 2
    %v156 = vadd.f32 %v154, %v155
    %v157 = vrot.slane %v156, 1
    %v158 = vadd.f32 %v156, %v157
    %s159 = vtos %v158
    %v160 = vmul.f32 %v103, %v103
    %v161 = vsel %vm112, %v160, 0.0
    %162 = vadd.xlane.f32.xlu0 %v161
    %v163 = vpop.xlane.xlu0 %162
    %v164 = vrot.slane %v163, 4
    %v165 = vadd.f32 %v163, %v164
    %v166 = vrot.slane %v165, 2
    %v167 = vadd.f32 %v165, %v166
    %v168 = vrot.slane %v167, 1
    %v169 = vadd.f32 %v167, %v168
    %s170 = vtos %v169
    %vm171 = vcmp.eq.s32.totalorder %v130, 0
    %v172 = vstv %s148
    %v173 = vsel %vm171, %v172, 0.0
    %vm174 = vcmp.eq.s32.totalorder %v130, 1
    %v175 = vstv %s159
    %v176 = vsel %vm174, %v175, 0.0
    %v177 = vadd.f32 %v173, %v176
    %vm178 = vcmp.eq.s32.totalorder %v130, 2
    %v179 = vstv %s170
    %v180 = vsel %vm178, %v179, 0.0
    %v181 = vadd.f32 %v177, %v180
    %182 = vst [vmem:[#allocation16] sm:$0x1] %v181
    // Predicated region
    $region37: #{tpu_custom_call.1} parent=1 // pred_check
      _
    $region38: #{tpu_custom_call.1} parent=1 // pred_check_branch
      %184 = sbr.rel (0) target = $region40
    $region39: #{tpu_custom_call.1} parent=1 // pred_region
      %s186 = ssub.s32 16, 16
      %187 = vsyncadd [#allocation11], %s186
      %s189 = sshll.u32 [#allocation15], 4
      %s190 = int_to_ptr.vmem [resolvable:$true] %s189
      %192 = dma.vmem_to_hbm [thread:$0]  %s190, 16, %s7, [#allocation11]
    $region40: #{tpu_custom_call.1} parent=1 // pred_fallthru
      _
    // Predicated region
    $region41: #{tpu_custom_call.1} parent=1 // pred_check
      _
    $region42: #{tpu_custom_call.1} parent=1 // pred_check_branch
      %194 = sbr.rel (0) target = $region44
    $region43: #{tpu_custom_call.1} parent=1 // pred_region
      %s196 = ssub.s32 16, 16
      %197 = vsyncadd [#allocation17], %s196
      %s199 = sshll.u32 [#allocation16], 4
      %s200 = int_to_ptr.vmem [resolvable:$true] %s199
      %202 = dma.vmem_to_hbm [thread:$0]  %s200, 16, %s8, [#allocation17]
    $region44: #{tpu_custom_call.1} parent=1 // pred_fallthru
      _
    // Predicated region
    $region45: #{tpu_custom_call.1} parent=1 // pred_check
      _
    $region46: #{tpu_custom_call.1} parent=1 // pred_check_branch
      %204 = sbr.rel (0) target = $region48
    $region47: #{tpu_custom_call.1} parent=1 // pred_region
      %205 = dma.done [#allocation11], 16
    $region48: #{tpu_custom_call.1} parent=1 // pred_fallthru
      _
    // Predicated region
    $region49: #{tpu_custom_call.1} parent=1 // pred_check
      _
    $region50: #{tpu_custom_call.1} parent=1 // pred_check_branch
      %207 = sbr.rel (0) target = $region52
    $region51: #{tpu_custom_call.1} parent=1 // pred_region
      %208 = dma.done [#allocation17], 16
    $region52: #{tpu_custom_call.1} parent=1 // pred_fallthru
      _
    %209 = vsyncpa [#allocation10], 1
    %210 = vsyncpa [#allocation13], 1
    %211 = vsyncpa [#allocation11], 1
    %212 = vsyncpa [#allocation17], 1

</llo_original>
